<compile_context>
chip_gen: v6e
topology: v6e:2x2x1
jax: 0.10.0
libtpu: 0.0.40
codegen_flags: <defaults>
</compile_context>

<pallas_src>
import numpy as np
import jax
import jax.numpy as jnp
from jax.experimental import pallas as pl
from jax.experimental.pallas import tpu as pltpu


def _ident_dma_kernel(x_hbm_ref, o_hbm_ref, sem):
    # Single full-array HBM->HBM DMA: raw DMA/HBM bandwidth, no VMEM staging,
    # no grid, no (8,128) tiling constraints.
    cp = pltpu.make_async_copy(x_hbm_ref, o_hbm_ref, sem)
    cp.start()
    cp.wait()


def _ident_pallas(x):
    return pl.pallas_call(
        _ident_dma_kernel,
        out_shape=jax.ShapeDtypeStruct(x.shape, x.dtype),
        in_specs=[pl.BlockSpec(memory_space=pl.ANY)],
        out_specs=pl.BlockSpec(memory_space=pl.ANY),
        scratch_shapes=[pltpu.SemaphoreType.DMA(())],
    )(x)


def ident(*args, run_kernel=True):
    """Pallas equivalent of Ident.forward(*args): returns args[0] unchanged.

    `run_kernel=False` short-circuits the pallas_call entirely (identity is
    semantically free); the default still exercises the DMA kernel so the op
    has a real on-TPU implementation.
    """
    x = args[0]

    # Fidelity with the PyTorch module: forward(*args) accepts anything.
    if not isinstance(x, (jax.Array, np.ndarray)):
        return x

    x = jnp.asarray(x)

    # Degenerate cases where launching a kernel is pointless / fragile.
    if (not run_kernel) or x.size == 0 or x.ndim == 0:
        return x

    return _ident_pallas(x)


if __name__ == "__main__":
    key = jax.random.PRNGKey(0)
    k1, k2, k3 = jax.random.split(key, 3)

    # Primary example input (activation-sized, NCHW-style shape).
    x = jax.random.normal(k1, (2, 4, 16, 16), dtype=jnp.float32)
    out = jax.block_until_ready(ident(x))
    assert out.shape == x.shape and out.dtype == x.dtype
    np.testing.assert_array_equal(np.asarray(out), np.asarray(x))

    # Odd, non-aligned shape; extra args are ignored exactly like the PyTorch
    # module's forward(*args).
    y = jax.random.normal(k2, (3, 5, 7), dtype=jnp.float32)
    out_y = jax.block_until_ready(ident(y, "extra_arg", 123))
    np.testing.assert_array_equal(np.asarray(out_y), np.asarray(y))

    # Sub-32-bit dtype (the DMA path is dtype agnostic).
    z = jax.random.normal(k3, (8, 256), dtype=jnp.bfloat16)
    out_z = jax.block_until_ready(ident(z))
    assert out_z.dtype == z.dtype
    np.testing.assert_array_equal(np.asarray(out_z), np.asarray(z))

    print("KERNEL_OK")
</pallas_src>

<mosaic_0001>
module attributes {stable_mosaic.version = 11 : i64} {
  func.func @_ident_dma_kernel(%arg0: memref<2x4x16x16xf32, #tpu.memory_space<any>>, %arg1: memref<2x4x16x16xf32, #tpu.memory_space<any>>, %arg2: memref<!tpu.dma_semaphore, #tpu.memory_space<semaphore_mem>>) attributes {dimension_semantics = [], scalar_prefetch = 0 : i64, scratch_operands = 1 : i64, tpu.core_type = #tpu.core_type<tc>} {
    tpu.enqueue_dma source(%arg0 : memref<2x4x16x16xf32, #tpu.memory_space<any>>) target(%arg1 : memref<2x4x16x16xf32, #tpu.memory_space<any>>) target_semaphore(%arg2 : memref<!tpu.dma_semaphore, #tpu.memory_space<semaphore_mem>>)
    tpu.wait_dma2 semaphore(%arg2 : memref<!tpu.dma_semaphore, #tpu.memory_space<semaphore_mem>>) src(%arg0 : memref<2x4x16x16xf32, #tpu.memory_space<any>>) dst(%arg1 : memref<2x4x16x16xf32, #tpu.memory_space<any>>)
    return
  }
}

</mosaic_0001>

<llo_original>
// kernel: tpu_custom_call.1
$region0: #{tpu_custom_call.1}
  #allocation0 [shape = 'u32[]', space=smem, size = 0x4, offset = 0x4, fixed_abs, tag = 'smem constant byte address 0x4 - core index']
  #allocation1 [shape = 'u32[144,128]{1,0:T(1,128)}', space=vmem, size = 0x12000, scoped, tag = 'internal scratch']
  #allocation2 [shape = 's32[1]{0}', space=sflag, size = 0x4, scoped, tag = 'scratch operand']
  #allocation3 [shape = 's32[]', space=sflag, size = 0x4, offset = 0, fixed_abs, tag = 'sflag constant byte address 0x0 - dummy sync flag']
  #allocation4 [shape = 'u32[0]{0}', space=smem, size = 0, offset = 0, fixed_abs, tag = 'smem constant byte address 0x0 - null']
  %s0 = inlined_call_operand.hbm [shape: f32[2,4,16,16], index: 0, kind: input, shape index: {}]
  %s1 = inlined_call_operand.hbm [shape: f32[2,4,16,16], index: 1, kind: output, shape index: {}]
  %s2 = sld [smem:[#allocation0]]
  $region2: #{tpu_custom_call.1} parent=0
    _
  %s4 = ssub.s32 1, %s2
  %s5 = scalar_select 0, %s4, %s2
  %s7 = sshll.u32 1, 14
  %s8 = sxor.u32 4294967295, %s7
  %12 = dma.general %s0, 2048, %s1, [#allocation2], 131072, [#allocation4], 0, 0
  %s13 = smul.u32 2, 4
  %s14 = smul.u32 %s13, 16
  %s15 = smul.u32 %s14, 1
  %s16 = sshll.u32 %s15, 4
  %17 = dma.done [#allocation2], %s16
  %18 = vsyncmov [#allocation2]
  %s19 = vpop.sfrf %18
  %p20 = scmp.eq.s32.totalorder %s19, 0
  %p21 = pneg %p20
  %23 = shalt.err (%p21)

</llo_original>
